<compile_context>
chip_gen: v6e
topology: v6e:2x2x1
jax: 0.10.0
libtpu: 0.0.40
codegen_flags: <defaults>
</compile_context>

<pallas_src>
import functools
import math

import jax
import jax.numpy as jnp
from jax.scipy.linalg import block_diag
from jax.experimental import pallas as pl
from jax.experimental.pallas import tpu as pltpu


# ----------------------------------------------------------------------------
# small helpers
# ----------------------------------------------------------------------------
def _leaky_relu(x, slope=0.01):
    return jnp.where(x >= 0, x, slope * x)


def _elu(x):
    # guard the unselected branch so exp() never produces inf
    return jnp.where(x > 0, x, jnp.exp(jnp.minimum(x, 0.0)) - 1.0)


def _rup(x, m):
    return ((x + m - 1) // m) * m


def _nbytes(shape, dtype):
    return math.prod(shape) * jnp.dtype(dtype).itemsize


def _vmem_limit(block_bytes, scratch_bytes=0, extra_bytes=0):
    """Explicit VMEM budget: 2x (double-buffer) blocks + scratch + temporaries."""
    est = 2 * block_bytes + scratch_bytes + extra_bytes + (8 << 20)
    try:
        cap = pltpu.get_tpu_info().vmem_capacity_bytes
    except Exception:  # pragma: no cover - conservative fallback (v7x-safe)
        cap = 64 << 20
    return int(min(max(est, 32 << 20), cap - (4 << 20)))


def _pad_rows(x, rows, fill=0):
    if x.shape[0] == rows:
        return x
    pad = jnp.full((rows - x.shape[0],) + x.shape[1:], fill, dtype=x.dtype)
    return jnp.concatenate([x, pad], axis=0)


# ----------------------------------------------------------------------------
# kernel 0: z_h = fc_h(h) for all heads (node-tiled, fully parallel)
# ----------------------------------------------------------------------------
def zh_kernel(h_ref, wh_ref, zh_ref):
    zh_ref[...] = jnp.dot(h_ref[...], wh_ref[...],
                          preferred_element_type=jnp.float32).astype(zh_ref.dtype)


# ----------------------------------------------------------------------------
# kernel 1: per edge tile -> e_out = elu(fc_proj(cat)) (+res), attn logits
# ----------------------------------------------------------------------------
def edge_kernel(e_ref, src_ref, dst_ref, zh_ref, we_ref, wext_ref, b_ref,
                eout_ref, attn_ref, *, hout, n_nodes, residual):
    cdt = zh_ref.dtype
    e_in = e_ref[...]                                                 # (TE, in)

    # fc_e for all heads at once (lane-dense H*out columns)
    z_e = jnp.dot(e_in, we_ref[...], preferred_element_type=jnp.float32)

    # one-hot gathers built in-kernel from int32 indices (no (E,N) HBM input)
    te = e_in.shape[0]
    iota = jax.lax.broadcasted_iota(jnp.int32, (te, n_nodes), 1)
    oh_src = (iota == src_ref[...]).astype(cdt)                       # (TE, N)
    oh_dst = (iota == dst_ref[...]).astype(cdt)                       # (TE, N)

    z_h = zh_ref[...]
    z_src = jnp.dot(oh_src, z_h, preferred_element_type=jnp.float32)  # (TE, H*out)
    z_dst = jnp.dot(oh_dst, z_h, preferred_element_type=jnp.float32)  # (TE, H*out)

    # single fused matmul: [z_e | z_src | z_dst] @ [block-diag proj | attn]
    z_cat = jnp.concatenate([z_e, z_src, z_dst], axis=1).astype(cdt)  # (TE, 3*H*out)
    r = jnp.dot(z_cat, wext_ref[...], preferred_element_type=jnp.float32)

    e_proj = r[:, :hout] + b_ref[...]
    attn_ref[...] = _leaky_relu(r[:, hout:])                          # per-head, lane-replicated

    e_act = _elu(e_proj)
    if residual:
        e_act = e_act + e_in.astype(jnp.float32)
    eout_ref[...] = e_act


# ----------------------------------------------------------------------------
# kernel 2: edge-tiled softmax aggregation into resident (N, H*out) accumulators
# ----------------------------------------------------------------------------
def aggregate_kernel(zh_ref, attn_ref, src_ref, dstrow_ref, hin_ref,
                     hout_ref, numer_ref, denom_ref, *, n_nodes, residual):
    step = pl.program_id(0)

    @pl.when(step == 0)
    def _init():
        numer_ref[...] = jnp.zeros_like(numer_ref)
        denom_ref[...] = jnp.zeros_like(denom_ref)

    cdt = zh_ref.dtype
    te = attn_ref.shape[0]

    oh_src = (jax.lax.broadcasted_iota(jnp.int32, (te, n_nodes), 1)
              == src_ref[...]).astype(cdt)                            # (TE, N)
    oh_dst_t = (jax.lax.broadcasted_iota(jnp.int32, (n_nodes, te), 0)
                == dstrow_ref[...]).astype(cdt)                       # (N, TE)

    z_src = jnp.dot(oh_src, zh_ref[...], preferred_element_type=jnp.float32)
    # attn is already shifted by the per-destination max -> exp() in (0, 1]
    w = jnp.exp(attn_ref[...])                                        # (TE, H*out)

    numer_ref[...] += jnp.dot(oh_dst_t, (w * z_src).astype(cdt),
                              preferred_element_type=jnp.float32)
    denom_ref[...] += jnp.dot(oh_dst_t, w.astype(cdt),
                              preferred_element_type=jnp.float32)

    @pl.when(step == pl.num_programs(0) - 1)
    def _finalize():
        denom = denom_ref[...]
        safe = jnp.where(denom > 0.0, denom, 1.0)
        h_new = numer_ref[...] * pl.reciprocal(safe, approx=False)
        h_act = _elu(h_new)
        if residual:
            h_act = h_act + hin_ref[...].astype(jnp.float32)
        hout_ref[...] = h_act


# ----------------------------------------------------------------------------
# fused weights: stacked fc_h / fc_e, block-diag [proj | attn] extended weight
# ----------------------------------------------------------------------------
def _build_fused_weights(params, in_dim, num_heads, out_dim, dtype):
    hout = num_heads * out_dim
    wh = jnp.transpose(params['wh_t'], (1, 0, 2)).reshape(in_dim, hout)
    we = jnp.transpose(params['we_t'], (1, 0, 2)).reshape(in_dim, hout)
    b = jnp.transpose(params['bproj'], (1, 0, 2)).reshape(1, hout)

    wp = params['wproj_t']   # (H, 3*out, out)
    a = params['a']          # (H, 3*out, 1)
    pieces = []
    for p in range(3):       # z_e, z_src, z_dst pieces of the concat
        lo, hi = p * out_dim, (p + 1) * out_dim
        proj = block_diag(*[wp[k, lo:hi, :] for k in range(num_heads)])
        attn = block_diag(*[jnp.tile(a[k, lo:hi, :], (1, out_dim))
                            for k in range(num_heads)])
        pieces.append(jnp.concatenate([proj, attn], axis=1))          # (H*out, 2*H*out)
    w_ext = jnp.concatenate(pieces, axis=0)                           # (3*H*out, 2*H*out)
    return (wh.astype(dtype), we.astype(dtype), w_ext.astype(dtype),
            b.astype(jnp.float32))


# ----------------------------------------------------------------------------
# forward wrapper
# ----------------------------------------------------------------------------
def gat_layer_forward(h, e, src, dst, params, residual=True, *,
                      edge_tile=128, compute_dtype=jnp.bfloat16):
    """CustomGATLayerEdgeReprFeat.forward (merge='cat', eval mode)."""
    N, in_dim = h.shape
    E = e.shape[0]
    H, _, out_dim = params['wh_t'].shape
    hout = H * out_dim
    residual = bool(residual and in_dim == hout)
    f32 = jnp.float32
    cs = jnp.dtype(compute_dtype).itemsize

    # ---- padding to TPU-friendly sizes (padded edges use index -1 -> zero one-hot)
    n_pad = _rup(N, 8)
    te = _rup(min(edge_tile, _rup(E, 8)), 8)
    e_pad = _rup(E, te)
    n_tiles = e_pad // te

    h_p = _pad_rows(h, n_pad).astype(compute_dtype)
    e_p = _pad_rows(e, e_pad).astype(compute_dtype)
    src_p = _pad_rows(src.astype(jnp.int32), e_pad, fill=-1)
    dst_p = _pad_rows(dst.astype(jnp.int32), e_pad, fill=-1)
    src_col = src_p.reshape(e_pad, 1)
    dst_col = dst_p.reshape(e_pad, 1)
    dst_row = dst_p.reshape(1, e_pad)

    wh, we, w_ext, bias = _build_fused_weights(params, in_dim, H, out_dim,
                                               compute_dtype)

    # ---- kernel 0: z_h = fc_h(h)   (node-tiled, 'parallel')
    tn = min(n_pad, 1024)
    n_pad_k0 = _rup(n_pad, tn)
    h_k0 = _pad_rows(h_p, n_pad_k0)
    blk0 = (_nbytes((tn, in_dim), compute_dtype) + _nbytes((in_dim, hout), compute_dtype)
            + _nbytes((tn, hout), compute_dtype))
    z_h = pl.pallas_call(
        zh_kernel,
        out_shape=jax.ShapeDtypeStruct((n_pad_k0, hout), compute_dtype),
        grid=(n_pad_k0 // tn,),
        in_specs=[pl.BlockSpec((tn, in_dim), lambda i: (i, 0)),
                  pl.BlockSpec((in_dim, hout), lambda i: (0, 0))],
        out_specs=pl.BlockSpec((tn, hout), lambda i: (i, 0)),
        compiler_params=pltpu.CompilerParams(
            dimension_semantics=("parallel",),
            vmem_limit_bytes=_vmem_limit(blk0)),
    )(h_k0, wh)[:n_pad]

    # ---- kernel 1: edge features / attention logits (edge-tiled, 'parallel')
    blk1 = (_nbytes((te, in_dim), compute_dtype) + 2 * _nbytes((te, 1), jnp.int32)
            + _nbytes((n_pad, hout), compute_dtype)
            + _nbytes((in_dim, hout), compute_dtype)
            + _nbytes((3 * hout, 2 * hout), compute_dtype)
            + _nbytes((1, hout), f32) + 2 * _nbytes((te, hout), f32))
    extra1 = 2 * te * n_pad * cs + 8 * te * hout * 4
    e_out_p, attn_p = pl.pallas_call(
        functools.partial(edge_kernel, hout=hout, n_nodes=n_pad,
                          residual=residual),
        out_shape=[jax.ShapeDtypeStruct((e_pad, hout), f32),
                   jax.ShapeDtypeStruct((e_pad, hout), f32)],
        grid=(n_tiles,),
        in_specs=[pl.BlockSpec((te, in_dim), lambda i: (i, 0)),       # e
                  pl.BlockSpec((te, 1), lambda i: (i, 0)),            # src ids
                  pl.BlockSpec((te, 1), lambda i: (i, 0)),            # dst ids
                  pl.BlockSpec((n_pad, hout), lambda i: (0, 0)),      # z_h (resident)
                  pl.BlockSpec((in_dim, hout), lambda i: (0, 0)),     # We
                  pl.BlockSpec((3 * hout, 2 * hout), lambda i: (0, 0)),  # W_ext
                  pl.BlockSpec((1, hout), lambda i: (0, 0))],         # bias
        out_specs=[pl.BlockSpec((te, hout), lambda i: (i, 0)),
                   pl.BlockSpec((te, hout), lambda i: (i, 0))],
        compiler_params=pltpu.CompilerParams(
            dimension_semantics=("parallel",),
            vmem_limit_bytes=_vmem_limit(blk1, extra_bytes=extra1)),
    )(e_p, src_col, dst_col, z_h, we, w_ext, bias)

    # ---- host glue: per-destination softmax max (numerical robustness)
    attn = attn_p[:E]
    m = jax.ops.segment_max(attn, dst, num_segments=N)
    m = jnp.where(jnp.isfinite(m), m, 0.0)          # zero-in-degree nodes
    attn_shift = attn - m[dst]                      # <= 0 per edge
    attn_shift_p = _pad_rows(attn_shift, e_pad)

    # ---- kernel 2: edge-tiled aggregation into resident accumulators
    blk2 = (_nbytes((n_pad, hout), compute_dtype) + _nbytes((te, hout), f32)
            + _nbytes((te, 1), jnp.int32) + _nbytes((1, te), jnp.int32)
            + _nbytes((n_pad, in_dim), compute_dtype) + _nbytes((n_pad, hout), f32))
    scratch2 = 2 * _nbytes((n_pad, hout), f32)
    extra2 = 2 * te * n_pad * cs + 4 * te * hout * 4
    h_out_p = pl.pallas_call(
        functools.partial(aggregate_kernel, n_nodes=n_pad, residual=residual),
        out_shape=jax.ShapeDtypeStruct((n_pad, hout), f32),
        grid=(n_tiles,),
        in_specs=[pl.BlockSpec((n_pad, hout), lambda i: (0, 0)),      # z_h
                  pl.BlockSpec((te, hout), lambda i: (i, 0)),         # shifted attn
                  pl.BlockSpec((te, 1), lambda i: (i, 0)),            # src ids
                  pl.BlockSpec((1, te), lambda i: (0, i)),            # dst ids (row)
                  pl.BlockSpec((n_pad, in_dim), lambda i: (0, 0))],   # h (residual)
        out_specs=pl.BlockSpec((n_pad, hout), lambda i: (0, 0)),
        scratch_shapes=[pltpu.VMEM((n_pad, hout), f32),
                        pltpu.VMEM((n_pad, hout), f32)],
        compiler_params=pltpu.CompilerParams(
            dimension_semantics=("arbitrary",),
            vmem_limit_bytes=_vmem_limit(blk2, scratch2, extra2)),
    )(z_h, attn_shift_p, src_col, dst_row, h_p)

    return h_out_p[:N], e_out_p[:E]


# ----------------------------------------------------------------------------
# pure-JAX reference (mirrors the PyTorch/DGL semantics, eval mode)
# ----------------------------------------------------------------------------
def reference_forward(h, e, src, dst, params, residual=True):
    N, in_dim = h.shape
    H, _, out_dim = params['wh_t'].shape
    hs, es = [], []
    for k in range(H):
        wh_t, we_t = params['wh_t'][k], params['we_t'][k]
        wp_t, b, a = params['wproj_t'][k], params['bproj'][k], params['a'][k]
        z_h = h @ wh_t
        z_e = e @ we_t
        z = jnp.concatenate([z_e, z_h[src], z_h[dst]], axis=1)
        e_proj = z @ wp_t + b
        attn = jax.nn.leaky_relu(z @ a, 0.01)[:, 0]
        m = jax.ops.segment_max(attn, dst, num_segments=N)
        m = jnp.where(jnp.isfinite(m), m, 0.0)
        ex = jnp.exp(attn - m[dst])
        denom = jax.ops.segment_sum(ex, dst, num_segments=N)
        denom = jnp.where(denom > 0, denom, 1.0)
        alpha = ex / denom[dst]
        h_new = jax.ops.segment_sum(alpha[:, None] * z_h[src], dst, num_segments=N)
        hs.append(jax.nn.elu(h_new))
        es.append(jax.nn.elu(e_proj))
    h_cat = jnp.concatenate(hs, axis=1)
    e_cat = jnp.concatenate(es, axis=1)
    if residual and in_dim == H * out_dim:
        h_cat = h + h_cat
        e_cat = e + e_cat
    return h_cat, e_cat


if __name__ == "__main__":
    # small shapes; in_dim = out_dim * num_heads = 128 so the residual branch
    # is active and H*out is lane-dense.  N / E deliberately unaligned to
    # exercise the padding path (pad nodes / dummy edges with index -1).
    N, E = 60, 500
    in_dim, out_dim, num_heads = 128, 16, 8

    key = jax.random.PRNGKey(0)
    ks = jax.random.split(key, 10)

    h = jax.random.normal(ks[0], (N, in_dim), dtype=jnp.float32)
    e = jax.random.normal(ks[1], (E, in_dim), dtype=jnp.float32)
    src = jax.random.randint(ks[2], (E,), 0, N)
    dst = jax.random.randint(ks[3], (E,), 0, N)

    scale = 0.1
    params = {
        'wh_t':    scale * jax.random.normal(ks[4], (num_heads, in_dim, out_dim), jnp.float32),
        'we_t':    scale * jax.random.normal(ks[5], (num_heads, in_dim, out_dim), jnp.float32),
        'wproj_t': scale * jax.random.normal(ks[6], (num_heads, 3 * out_dim, out_dim), jnp.float32),
        'bproj':   scale * jax.random.normal(ks[7], (num_heads, 1, out_dim), jnp.float32),
        'a':       scale * jax.random.normal(ks[8], (num_heads, 3 * out_dim, 1), jnp.float32),
    }

    h_ref, e_ref = reference_forward(h, e, src, dst, params, residual=True)

    # f32 compute path: tight tolerance
    h32, e32 = gat_layer_forward(h, e, src, dst, params, residual=True,
                                 edge_tile=128, compute_dtype=jnp.float32)
    jax.block_until_ready((h32, e32))
    assert h32.shape == (N, out_dim * num_heads)
    assert e32.shape == (E, out_dim * num_heads)
    assert jnp.allclose(h32, h_ref, atol=1e-4, rtol=1e-4), \
        f"h f32 mismatch: {jnp.max(jnp.abs(h32 - h_ref))}"
    assert jnp.allclose(e32, e_ref, atol=1e-4, rtol=1e-4), \
        f"e f32 mismatch: {jnp.max(jnp.abs(e32 - e_ref))}"

    # bf16 compute path (f32 accumulation): looser tolerance
    hbf, ebf = gat_layer_forward(h, e, src, dst, params, residual=True,
                                 edge_tile=128, compute_dtype=jnp.bfloat16)
    jax.block_until_ready((hbf, ebf))
    assert jnp.allclose(hbf, h_ref, atol=7e-2, rtol=7e-2), \
        f"h bf16 mismatch: {jnp.max(jnp.abs(hbf - h_ref))}"
    assert jnp.allclose(ebf, e_ref, atol=7e-2, rtol=7e-2), \
        f"e bf16 mismatch: {jnp.max(jnp.abs(ebf - e_ref))}"

    print("KERNEL_OK")
</pallas_src>

<mosaic_0001>
module attributes {stable_mosaic.version = 11 : i64} {
  func.func @zh_kernel(%arg0: i32, %arg1: memref<64x128xf32, #tpu.memory_space<vmem>>, %arg2: memref<128x128xf32, #tpu.memory_space<vmem>>, %arg3: memref<64x128xf32, #tpu.memory_space<vmem>>) attributes {dimension_semantics = [#tpu.dimension_semantics<parallel>], iteration_bounds = array<i64: 1>, scalar_prefetch = 0 : i64, scratch_operands = 0 : i64, tpu.core_type = #tpu.core_type<tc>, window_params = [{transform_indices = @transform_0, window_bounds = array<i64: 64, 128>}, {pipeline_mode = #tpu.pipeline_mode<synchronous>, transform_indices = @transform_1, window_bounds = array<i64: 128, 128>}, {transform_indices = @transform_2, window_bounds = array<i64: 64, 128>}]} {
    %c0 = arith.constant 0 : index
    %c0_0 = arith.constant 0 : index
    %0 = vector.load %arg1[%c0, %c0_0] : memref<64x128xf32, #tpu.memory_space<vmem>>, vector<64x128xf32>
    %c0_1 = arith.constant 0 : index
    %c0_2 = arith.constant 0 : index
    %1 = vector.load %arg2[%c0_1, %c0_2] : memref<128x128xf32, #tpu.memory_space<vmem>>, vector<128x128xf32>
    %cst = arith.constant dense<0.000000e+00> : vector<64x128xf32>
    %2 = tpu.matmul %0, %1, %cst {dimension_numbers = #tpu.dot_dimension_numbers<[1], [0], [0], [1], [0, 0, 1, 1], [], []>} : vector<64x128xf32>, vector<128x128xf32>, vector<64x128xf32> -> vector<64x128xf32>
    %c0_3 = arith.constant 0 : index
    %c0_4 = arith.constant 0 : index
    %3 = vector.load %arg3[%c0_3, %c0_4] : memref<64x128xf32, #tpu.memory_space<vmem>>, vector<64x128xf32>
    tpu.vector_store %arg3[%c0_3, %c0_4], %2 {strides = array<i32>} : memref<64x128xf32, #tpu.memory_space<vmem>>, vector<64x128xf32>,
    return
  }
  func.func @transform_0(%arg0: i32) -> (i32, i32) {
    %c0_i32 = arith.constant 0 : i32
    %c0_i32_0 = arith.constant 0 : i32
    return %arg0, %c0_i32 : i32, i32
  }
  func.func @transform_1(%arg0: i32) -> (i32, i32) {
    %c0_i32 = arith.constant 0 : i32
    %c0_i32_0 = arith.constant 0 : i32
    %c0_i32_1 = arith.constant 0 : i32
    return %c0_i32, %c0_i32_0 : i32, i32
  }
  func.func @transform_2(%arg0: i32) -> (i32, i32) {
    %c0_i32 = arith.constant 0 : i32
    %c0_i32_0 = arith.constant 0 : i32
    return %arg0, %c0_i32 : i32, i32
  }
}

</mosaic_0001>

<llo_original>
// kernel: tpu_custom_call.1
$region0: #{tpu_custom_call.1}
  #allocation0 [shape = 'u32[]', space=smem, size = 0x4, offset = 0x4, fixed_abs, tag = 'smem constant byte address 0x4 - core index']
  #allocation1 [shape = 'u32[144,128]{1,0:T(1,128)}', space=vmem, size = 0x12000, scoped, tag = 'internal scratch']
  %s0 = inlined_call_operand.hbm [shape: f32[64,128], index: 0, kind: input, shape index: {}]
  %s1 = inlined_call_operand.hbm [shape: f32[128,128], index: 1, kind: input, shape index: {}]
  %s2 = inlined_call_operand.hbm [shape: f32[64,128], index: 2, kind: output, shape index: {}]
  %s3 = sld [smem:[#allocation0]]
  $region26: #{tpu_custom_call.1} parent=0
    _
  %s5 = ssub.s32 1, %s3
  %s6 = scalar_select 0, %s5, %s3
  $region1: #{tpu_custom_call.1} parent=0
    #allocation2 [shape = 'u8[32768]{0}', space=vmem, size = 0x8000, scoped, tag = 'input window, operand 0, single buffered']
    #allocation3 [shape = 's32[1]{0}', space=sflag, size = 0x4, scoped, tag = 'scoped memory for tpu_custom_call.1']
    #allocation4 [shape = 's32[1]{0}', space=sflag, size = 0x4, scoped, tag = 'scoped memory for tpu_custom_call.1']
    #allocation5 [shape = 'u8[65536]{0}', space=vmem, size = 0x10000, scoped, tag = 'input window, operand 1, single buffered']
    #allocation6 [shape = 's32[1]{0}', space=sflag, size = 0x4, scoped, tag = 'scoped memory for tpu_custom_call.1']
    #allocation7 [shape = 'u8[32768]{0}', space=vmem, size = 0x8000, scoped, tag = 'output window, operand 0, single buffered']
    %7 = vsyncpa [#allocation3], 0
    %8 = vsyncpa [#allocation6], 0
    %9 = vsyncpa [#allocation4], 0
    // Predicated region
    $region2: #{tpu_custom_call.1} parent=1 // pred_check
      _
    $region3: #{tpu_custom_call.1} parent=1 // pred_check_branch
      %11 = sbr.rel (0) target = $region5
    $region4: #{tpu_custom_call.1} parent=1 // pred_region
      %s13 = ssub.s32 1024, 1024
      %14 = vsyncadd [#allocation3], %s13
      %s15 = sshll.u32 [#allocation2], 4
      %s16 = int_to_ptr.vmem [resolvable:$true] %s15
      %21 = dma.hbm_to_vmem [thread:$0]  %s0, 1024, %s16, [#allocation3], 128, 128, 8
    $region5: #{tpu_custom_call.1} parent=1 // pred_fallthru
      _
    // Predicated region
    $region6: #{tpu_custom_call.1} parent=1 // pred_check
      _
    $region7: #{tpu_custom_call.1} parent=1 // pred_check_branch
      %23 = sbr.rel (0) target = $region9
    $region8: #{tpu_custom_call.1} parent=1 // pred_region
      %s25 = ssub.s32 2048, 2048
      %26 = vsyncadd [#allocation6], %s25
      %s27 = sshll.u32 [#allocation5], 4
      %s28 = int_to_ptr.vmem [resolvable:$true] %s27
      %33 = dma.hbm_to_vmem [thread:$0]  %s1, 2048, %s28, [#allocation6], 128, 128, 8
    $region9: #{tpu_custom_call.1} parent=1 // pred_fallthru
      _
    // Predicated region
    $region10: #{tpu_custom_call.1} parent=1 // pred_check
      _
    $region11: #{tpu_custom_call.1} parent=1 // pred_check_branch
      %35 = sbr.rel (0) target = $region13
    $region12: #{tpu_custom_call.1} parent=1 // pred_region
      %36 = dma.done [#allocation3], 1024
    $region13: #{tpu_custom_call.1} parent=1 // pred_fallthru
      _
    // Predicated region
    $region14: #{tpu_custom_call.1} parent=1 // pred_check
      _
    $region15: #{tpu_custom_call.1} parent=1 // pred_check_branch
      %38 = sbr.rel (0) target = $region17
    $region16: #{tpu_custom_call.1} parent=1 // pred_region
      %39 = dma.done [#allocation6], 2048
    $region17: #{tpu_custom_call.1} parent=1 // pred_fallthru
      _
    %v40 = vld [vmem:[#allocation2] sm:$0xff]
    %v41 = vld [vmem:[#allocation2 + $0x8] sm:$0xff]
    %v42 = vld [vmem:[#allocation2 + $0x10] sm:$0xff]
    %v43 = vld [vmem:[#allocation2 + $0x18] sm:$0xff]
    %v44 = vld [vmem:[#allocation2 + $0x20] sm:$0xff]
    %v45 = vld [vmem:[#allocation2 + $0x28] sm:$0xff]
    %v46 = vld [vmem:[#allocation2 + $0x30] sm:$0xff]
    %v47 = vld [vmem:[#allocation2 + $0x38] sm:$0xff]
    %v48 = vld [vmem:[#allocation5] sm:$0xff]
    %v49 = vld [vmem:[#allocation5 + $0x8] sm:$0xff]
    %v50 = vld [vmem:[#allocation5 + $0x10] sm:$0xff]
    %v51 = vld [vmem:[#allocation5 + $0x18] sm:$0xff]
    %v52 = vld [vmem:[#allocation5 + $0x20] sm:$0xff]
    %v53 = vld [vmem:[#allocation5 + $0x28] sm:$0xff]
    %v54 = vld [vmem:[#allocation5 + $0x30] sm:$0xff]
    %v55 = vld [vmem:[#allocation5 + $0x38] sm:$0xff]
    %v56 = vld [vmem:[#allocation5 + $0x40] sm:$0xff]
    %v57 = vld [vmem:[#allocation5 + $0x48] sm:$0xff]
    %v58 = vld [vmem:[#allocation5 + $0x50] sm:$0xff]
    %v59 = vld [vmem:[#allocation5 + $0x58] sm:$0xff]
    %v60 = vld [vmem:[#allocation5 + $0x60] sm:$0xff]
    %v61 = vld [vmem:[#allocation5 + $0x68] sm:$0xff]
    %v62 = vld [vmem:[#allocation5 + $0x70] sm:$0xff]
    %v63 = vld [vmem:[#allocation5 + $0x78] sm:$0xff]
    %64 = vmatprep.subr.mxu0 0.0
    %65 = vmatpush1.msra.mxu0 %v63
    %66 = vmatprep.subr.mxu0 0.0
    %67 = vmatpush1.msra.mxu0 %v62
    %68 = vmatprep.subr.mxu0 0.0
    %69 = vmatpush1.msra.mxu0 %v61
    %70 = vmatprep.subr.mxu0 0.0
    %71 = vmatpush1.msra.mxu0 %v60
    %72 = vmatprep.subr.mxu0 0.0
    %73 = vmatpush1.msra.mxu0 %v59
    %74 = vmatprep.subr.mxu0 0.0
    %75 = vmatpush1.msra.mxu0 %v58
    %76 = vmatprep.subr.mxu0 0.0
    %77 = vmatpush1.msra.mxu0 %v57
    %78 = vmatprep.subr.mxu0 0.0
    %79 = vmatpush1.msra.mxu0 %v56
    %80 = vmatprep.subr.mxu0 0.0
    %81 = vmatpush1.msra.mxu0 %v55
    %82 = vmatprep.subr.mxu0 0.0
    %83 = vmatpush1.msra.mxu0 %v54
    %84 = vmatprep.subr.mxu0 0.0
    %85 = vmatpush1.msra.mxu0 %v53
    %86 = vmatprep.subr.mxu0 0.0
    %87 = vmatpush1.msra.mxu0 %v52
    %88 = vmatprep.subr.mxu0 0.0
    %89 = vmatpush1.msra.mxu0 %v51
    %90 = vmatprep.subr.mxu0 0.0
    %91 = vmatpush1.msra.mxu0 %v50
    %92 = vmatprep.subr.mxu0 0.0
    %93 = vmatpush1.msra.mxu0 %v49
    %94 = vmatprep.subr.mxu0 0.0
    %95 = vmatpush1.msra.mxu0 %v48
    %96 = vmatprep.subr.mxu0 0.0
    %97 = vmatpush2.msra.mxu0 0.0
    %98 = vmatprep.subr.mxu0 0.0
    %99 = vmatpush2.msra.mxu0 0.0
    %100 = vmatprep.subr.mxu0 0.0
    %101 = vmatpush2.msra.mxu0 0.0
    %102 = vmatprep.subr.mxu0 0.0
    %103 = vmatpush2.msra.mxu0 0.0
    %104 = vmatprep.subr.mxu0 0.0
    %105 = vmatpush2.msra.mxu0 0.0
    %106 = vmatprep.subr.mxu0 0.0
    %107 = vmatpush2.msra.mxu0 0.0
    %108 = vmatprep.subr.mxu0 0.0
    %109 = vmatpush2.msra.mxu0 0.0
    %110 = vmatprep.subr.mxu0 0.0
    %111 = vmatpush2.msra.mxu0 0.0
    %112 = vmatprep.subr.mxu0 0.0
    %113 = vmatpush2.msra.mxu0 0.0
    %114 = vmatprep.subr.mxu0 0.0
    %115 = vmatpush2.msra.mxu0 0.0
    %116 = vmatprep.subr.mxu0 0.0
    %117 = vmatpush2.msra.mxu0 0.0
    %118 = vmatprep.subr.mxu0 0.0
    %119 = vmatpush2.msra.mxu0 0.0
    %120 = vmatprep.subr.mxu0 0.0
    %121 = vmatpush2.msra.mxu0 0.0
    %122 = vmatprep.subr.mxu0 0.0
    %123 = vmatpush2.msra.mxu0 0.0
    %124 = vmatprep.subr.mxu0 0.0
    %125 = vmatpush2.msra.mxu0 0.0
    %126 = vmatprep.subr.mxu0 0.0
    %127 = vmatpush2.msra.mxu0 0.0
    %128 = vmatprep.mubr.f32.mxu0 0.0
    %129 = vmatmul.mubr.f32.gmra.mxu0 %v40
    %v130 = vpop.f32.mrf.mxu0
    %v131 = vadd.f32 0.0, %v130
    %v132 = vpop.f32.mrf.mxu0
    %133 = vmatprep.mubr.f32.mxu0 0.0
    %134 = vmatmul.mubr.f32.gmra.mxu0 %v41
    %v135 = vpop.f32.mrf.mxu0
    %v136 = vadd.f32 0.0, %v135
    %v137 = vpop.f32.mrf.mxu0
    %138 = vmatprep.mubr.f32.mxu0 0.0
    %139 = vmatmul.mubr.f32.gmra.mxu0 %v42
    %v140 = vpop.f32.mrf.mxu0
    %v141 = vadd.f32 0.0, %v140
    %v142 = vpop.f32.mrf.mxu0
    %143 = vmatprep.mubr.f32.mxu0 0.0
    %144 = vmatmul.mubr.f32.gmra.mxu0 %v43
    %v145 = vpop.f32.mrf.mxu0
    %v146 = vadd.f32 0.0, %v145
    %v147 = vpop.f32.mrf.mxu0
    %148 = vmatprep.mubr.f32.mxu0 0.0
    %149 = vmatmul.mubr.f32.gmra.mxu0 %v44
    %v150 = vpop.f32.mrf.mxu0
    %v151 = vadd.f32 0.0, %v150
    %v152 = vpop.f32.mrf.mxu0
    %153 = vmatprep.mubr.f32.mxu0 0.0
    %154 = vmatmul.mubr.f32.gmra.mxu0 %v45
    %v155 = vpop.f32.mrf.mxu0
    %v156 = vadd.f32 0.0, %v155
    %v157 = vpop.f32.mrf.mxu0
    %158 = vmatprep.mubr.f32.mxu0 0.0
    %159 = vmatmul.mubr.f32.gmra.mxu0 %v46
    %v160 = vpop.f32.mrf.mxu0
    %v161 = vadd.f32 0.0, %v160
    %v162 = vpop.f32.mrf.mxu0
    %163 = vmatprep.mubr.f32.mxu0 0.0
    %164 = vmatmul.mubr.f32.gmra.mxu0 %v47
    %v165 = vpop.f32.mrf.mxu0
    %v166 = vadd.f32 0.0, %v165
    %v167 = vpop.f32.mrf.mxu0
    %168 = vdwg.mxu0
    %169 = vst [vmem:[#allocation7] sm:$0xff] %v131
    %170 = vst [vmem:[#allocation7 + $0x8] sm:$0xff] %v136
    %171 = vst [vmem:[#allocation7 + $0x10] sm:$0xff] %v141
    %172 = vst [vmem:[#allocation7 + $0x18] sm:$0xff] %v146
    %173 = vst [vmem:[#allocation7 + $0x20] sm:$0xff] %v151
    %174 = vst [vmem:[#allocation7 + $0x28] sm:$0xff] %v156
    %175 = vst [vmem:[#allocation7 + $0x30] sm:$0xff] %v161
    %176 = vst [vmem:[#allocation7 + $0x38] sm:$0xff] %v166
    // Predicated region
    $region18: #{tpu_custom_call.1} parent=1 // pred_check
      _
    $region19: #{tpu_custom_call.1} parent=1 // pred_check_branch
      %178 = sbr.rel (0) target = $region21
    $region20: #{tpu_custom_call.1} parent=1 // pred_region
      %s180 = ssub.s32 1024, 1024
      %181 = vsyncadd [#allocation4], %s180
      %s182 = sshll.u32 [#allocation7], 4
      %s183 = int_to_ptr.vmem [resolvable:$true] %s182
      %188 = dma.vmem_to_hbm [thread:$0]  %s183, 1024, %s2, [#allocation4], 128, 128, 8
    $region21: #{tpu_custom_call.1} parent=1 // pred_fallthru
      _
    // Predicated region
    $region22: #{tpu_custom_call.1} parent=1 // pred_check
      _
    $region23: #{tpu_custom_call.1} parent=1 // pred_check_branch
      %190 = sbr.rel (0) target = $region25
    $region24: #{tpu_custom_call.1} parent=1 // pred_region
      %191 = dma.done [#allocation4], 1024
    $region25: #{tpu_custom_call.1} parent=1 // pred_fallthru
      _
    %192 = vsyncpa [#allocation3], 1
    %193 = vsyncpa [#allocation6], 1
    %194 = vsyncpa [#allocation4], 1

</llo_original>
